<compile_context>
chip_gen: v7x
topology: tpu7x:2x2x1
jax: 0.10.0
libtpu: 0.0.40
codegen_flags: <defaults>
</compile_context>

<pallas_src>
import functools

import jax
import jax.numpy as jnp
from jax.experimental import pallas as pl
from jax.experimental.pallas import tpu as pltpu

DEFAULT_BETA = 100.0

_LANE_CANDIDATES = (4096, 2048, 1024, 512, 256, 128)
_MAX_BLOCK_BYTES = 8 * 1024 * 1024       # per-buffer ceiling (v6e/v5e)
_RAGGED_BLOCK_ELEMS = 128 * 1024         # 1-D fallback block (multiple of 128)


def _swish_kernel(x_ref, o_ref, *, beta, compute_dtype):
    x = x_ref[...]
    if x.dtype != compute_dtype:
        x = x.astype(compute_dtype)
    # sigmoid(beta*x) via tanh: one EUP op instead of exp + divide.
    # Python-float scalars stay weakly typed, so bf16/f16 inputs compute natively.
    gate = 0.5 * (jnp.tanh((0.5 * beta) * x) + 1.0)
    o_ref[...] = (x * gate).astype(o_ref.dtype)


def _round_up(v, m):
    return ((v + m - 1) // m) * m


def _vmem_limit_bytes():
    """Explicit scoped-VMEM limit derived from the chip's physical VMEM."""
    cap = 64 * 1024 * 1024  # conservative fallback (v7x per-TC VMEM)
    try:
        info = pltpu.get_tpu_info()
        cap = int(getattr(info, "vmem_capacity_bytes", cap)) or cap
    except Exception:
        pass
    # ~3/4 of physical, capped with headroom below the 128 MiB VMEM parts.
    return max(32 * 1024 * 1024, min((cap * 3) // 4, 96 * 1024 * 1024))


def _compute_dtype(dtype):
    d = jnp.dtype(dtype)
    if d in (jnp.dtype(jnp.float32), jnp.dtype(jnp.bfloat16), jnp.dtype(jnp.float16)):
        return d
    return jnp.dtype(jnp.float32)


def _sublane_multiple(itemsize):
    # Native sublane tile: 8 for f32, 16 for bf16/f16, 32 for int8/fp8.
    return max(8, 32 // int(itemsize))


def _pick_lane(n):
    """Widest lane (multiple of 128) that exactly divides n; None if ragged."""
    for c in _LANE_CANDIDATES:
        if n >= c and n % c == 0:
            return c
    return None


def _pick_block_rows(rows, lane, itemsize, sublane, block_bytes_target):
    """Near-equal, sublane-multiple row blocks in an even-ish count so the
    'parallel' grid load-balances across both v7x TensorCores."""
    br = max(sublane, (block_bytes_target // (lane * itemsize)) // sublane * sublane)
    if br >= rows:
        if rows >= 2 * sublane:
            # Split into two near-equal blocks (v7x megacore sharding).
            return min(rows, _round_up(pl.cdiv(rows, 2), sublane))
        return rows  # single block spanning the (small) full first dim
    # Even number of near-equal blocks instead of full blocks + a tiny tail.
    pairs = pl.cdiv(rows, 2 * br)
    return min(rows, _round_up(pl.cdiv(rows, 2 * pairs), sublane))


def swish(x, beta=DEFAULT_BETA, *, in_place=False):
    """Elementwise Swish y = x * sigmoid(beta*x) (PyTorch Swish/SoftGate)."""
    orig_shape = x.shape
    orig_dtype = jnp.dtype(x.dtype)
    n = int(x.size)
    if n == 0:
        return x

    beta = float(beta)
    compute_dtype = _compute_dtype(orig_dtype)
    kernel = functools.partial(_swish_kernel, beta=beta, compute_dtype=compute_dtype)
    vmem_limit = _vmem_limit_bytes()
    block_bytes = max(512 * 1024, min(_MAX_BLOCK_BYTES, vmem_limit // 7))
    itemsize = orig_dtype.itemsize
    compiler_params = pltpu.CompilerParams(
        dimension_semantics=("parallel",),
        vmem_limit_bytes=vmem_limit,
    )

    x_flat = jnp.ravel(x)  # free (bitcast) reshape for contiguous inputs
    lane = _pick_lane(n)

    if lane is None:
        # Ragged path: n is not a multiple of 128.  Run over the flat 1-D view
        # with a cdiv grid; Pallas' partial last block absorbs the <128 tail,
        # so there is no jnp.pad / output-slice pass (each is a full HBM pass).
        block = min(n, _RAGGED_BLOCK_ELEMS)
        grid = (pl.cdiv(n, block),)
        out_flat = pl.pallas_call(
            kernel,
            out_shape=jax.ShapeDtypeStruct((n,), orig_dtype),
            grid_spec=pltpu.PrefetchScalarGridSpec(
                num_scalar_prefetch=0,
                grid=grid,
                in_specs=[pl.BlockSpec((block,), lambda i: (i,))],
                out_specs=pl.BlockSpec((block,), lambda i: (i,)),
            ),
            compiler_params=compiler_params,
            input_output_aliases=({0: 0} if in_place else {}),
        )(x_flat)
        return out_flat.reshape(orig_shape)

    # Aligned path: lane-dense 2D slab (free bitcast), unmasked wide stores.
    rows = n // lane
    sublane = _sublane_multiple(itemsize)
    block_rows = _pick_block_rows(rows, lane, itemsize, sublane, block_bytes)
    grid = (pl.cdiv(rows, block_rows),)
    x2d = x_flat.reshape(rows, lane)

    out2d = pl.pallas_call(
        kernel,
        out_shape=jax.ShapeDtypeStruct((rows, lane), orig_dtype),
        grid_spec=pltpu.PrefetchScalarGridSpec(
            num_scalar_prefetch=0,
            grid=grid,
            in_specs=[pl.BlockSpec((block_rows, lane), lambda i: (i, 0))],
            out_specs=pl.BlockSpec((block_rows, lane), lambda i: (i, 0)),
        ),
        compiler_params=compiler_params,
        input_output_aliases=({0: 0} if in_place else {}),
    )(x2d)
    return out2d.reshape(orig_shape)


if __name__ == "__main__":
    key = jax.random.PRNGKey(0)

    # NCHW input, small shapes: batch=2, channels=4, spatial=16x16 (aligned path).
    x = jax.random.normal(key, (2, 4, 16, 16), dtype=jnp.float32)
    y = jax.block_until_ready(swish(x))
    y_ref = x * jax.nn.sigmoid(DEFAULT_BETA * x)
    assert y.shape == x.shape and y.dtype == x.dtype
    assert jnp.allclose(y, y_ref, atol=1e-5, rtol=1e-5)

    # Multi-block 'parallel' grid with balanced (near-equal) blocks, f32.
    x2 = jax.random.normal(jax.random.PRNGKey(1), (8, 8, 64, 128), dtype=jnp.float32)
    y2 = jax.block_until_ready(swish(x2))
    assert jnp.allclose(y2, x2 * jax.nn.sigmoid(DEFAULT_BETA * x2), atol=1e-5, rtol=1e-5)

    # Native bf16 compute path (no whole-block f32 round trip).
    x3 = jax.random.normal(jax.random.PRNGKey(2), (4, 16, 256, 256), dtype=jnp.bfloat16)
    y3 = jax.block_until_ready(swish(x3))
    ref3 = x3.astype(jnp.float32) * jax.nn.sigmoid(DEFAULT_BETA * x3.astype(jnp.float32))
    assert y3.dtype == jnp.bfloat16
    assert jnp.allclose(y3.astype(jnp.float32), ref3, atol=2e-2, rtol=5e-2)

    # Ragged path (element count not a multiple of 128): single full 1-D block.
    x4 = jax.random.normal(jax.random.PRNGKey(3), (2, 5, 10, 10), dtype=jnp.float32)
    y4 = jax.block_until_ready(swish(x4))
    assert jnp.allclose(y4, x4 * jax.nn.sigmoid(DEFAULT_BETA * x4), atol=1e-5, rtol=1e-5)

    # Ragged path with a multi-step 1-D grid and a partial last block.
    x5 = jax.random.normal(jax.random.PRNGKey(4), (3, 7, 81, 81), dtype=jnp.float32)
    y5 = jax.block_until_ready(swish(x5))
    assert jnp.allclose(y5, x5 * jax.nn.sigmoid(DEFAULT_BETA * x5), atol=1e-5, rtol=1e-5)

    print("KERNEL_OK")
</pallas_src>

<mosaic_0001>
module attributes {stable_mosaic.version = 11 : i64} {
  func.func @_swish_kernel(%arg0: i32, %arg1: memref<1x2048xf32, #tpu.memory_space<vmem>>, %arg2: memref<1x2048xf32, #tpu.memory_space<vmem>>) attributes {dimension_semantics = [#tpu.dimension_semantics<parallel>], iteration_bounds = array<i64: 1>, scalar_prefetch = 0 : i64, scratch_operands = 0 : i64, tpu.core_type = #tpu.core_type<tc>, window_params = [{transform_indices = @transform_0, window_bounds = array<i64: 1, 2048>}, {transform_indices = @transform_1, window_bounds = array<i64: 1, 2048>}]} {
    %c0 = arith.constant 0 : index
    %c0_0 = arith.constant 0 : index
    %0 = vector.load %arg1[%c0, %c0_0] : memref<1x2048xf32, #tpu.memory_space<vmem>>, vector<1x2048xf32>
    %cst = arith.constant 5.000000e+01 : f32
    %1 = vector.broadcast %cst : f32 to vector<1x2048xf32>
    %2 = arith.mulf %1, %0 : vector<1x2048xf32>
    %3 = math.tanh %2 : vector<1x2048xf32>
    %cst_1 = arith.constant 1.000000e+00 : f32
    %4 = vector.broadcast %cst_1 : f32 to vector<1x2048xf32>
    %5 = arith.addf %3, %4 : vector<1x2048xf32>
    %cst_2 = arith.constant 5.000000e-01 : f32
    %6 = vector.broadcast %cst_2 : f32 to vector<1x2048xf32>
    %7 = arith.mulf %6, %5 : vector<1x2048xf32>
    %8 = arith.mulf %0, %7 : vector<1x2048xf32>
    %c0_3 = arith.constant 0 : index
    %c0_4 = arith.constant 0 : index
    %9 = vector.load %arg2[%c0_3, %c0_4] : memref<1x2048xf32, #tpu.memory_space<vmem>>, vector<1x2048xf32>
    tpu.vector_store %arg2[%c0_3, %c0_4], %8 {strides = array<i32>} : memref<1x2048xf32, #tpu.memory_space<vmem>>, vector<1x2048xf32>,
    return
  }
  func.func @transform_0(%arg0: i32) -> (i32, i32) {
    %c0_i32 = arith.constant 0 : i32
    %c0_i32_0 = arith.constant 0 : i32
    return %arg0, %c0_i32 : i32, i32
  }
  func.func @transform_1(%arg0: i32) -> (i32, i32) {
    %c0_i32 = arith.constant 0 : i32
    %c0_i32_0 = arith.constant 0 : i32
    return %arg0, %c0_i32 : i32, i32
  }
}

</mosaic_0001>

<llo_original>
// kernel: tpu_custom_call.1
$region0: #{tpu_custom_call.1}
  #allocation0 [shape = 'u32[]', space=smem, size = 0x4, offset = 0x4, fixed_abs, tag = 'smem constant byte address 0x4 - core index']
  #allocation1 [shape = 'u32[144,128]{1,0:T(1,128)}', space=vmem, size = 0x12000, scoped, tag = 'internal scratch']
  %s0 = inlined_call_operand.hbm [shape: f32[1,2048], index: 0, kind: input, shape index: {}]
  %s1 = inlined_call_operand.hbm [shape: f32[1,2048], index: 1, kind: output, shape index: {}]
  %s2 = sld [smem:[#allocation0]]
  $region18: #{tpu_custom_call.1} parent=0
    _
  %s4 = ssub.s32 1, %s2
  %s5 = scalar_select 0, %s4, %s2
  $region1: #{tpu_custom_call.1} parent=0
    #allocation2 [shape = 'u8[8192]{0}', space=vmem, size = 0x2000, scoped, tag = 'input window, operand 0, single buffered']
    #allocation3 [shape = 's32[1]{0}', space=sflag, size = 0x4, scoped, tag = 'scoped memory for tpu_custom_call.1']
    #allocation4 [shape = 's32[1]{0}', space=sflag, size = 0x4, scoped, tag = 'scoped memory for tpu_custom_call.1']
    #allocation5 [shape = 'u8[8192]{0}', space=vmem, size = 0x2000, scoped, tag = 'output window, operand 0, single buffered']
    %6 = vsyncpa [#allocation3], 0
    %7 = vsyncpa [#allocation4], 0
    // Predicated region
    $region2: #{tpu_custom_call.1} parent=1 // pred_check
      _
    $region3: #{tpu_custom_call.1} parent=1 // pred_check_branch
      %9 = sbr.rel (0) target = $region5
    $region4: #{tpu_custom_call.1} parent=1 // pred_region
      %s11 = ssub.s32 256, 256
      %12 = vsyncadd [#allocation3], %s11
      %s14 = sshll.u32 [#allocation2], 4
      %s15 = int_to_ptr.vmem [resolvable:$true] %s14
      %17 = dma.hbm_to_vmem [thread:$0]  %s0, 256, %s15, [#allocation3]
    $region5: #{tpu_custom_call.1} parent=1 // pred_fallthru
      _
    // Predicated region
    $region6: #{tpu_custom_call.1} parent=1 // pred_check
      _
    $region7: #{tpu_custom_call.1} parent=1 // pred_check_branch
      %19 = sbr.rel (0) target = $region9
    $region8: #{tpu_custom_call.1} parent=1 // pred_region
      %20 = dma.done [#allocation3], 256
    $region9: #{tpu_custom_call.1} parent=1 // pred_fallthru
      _
    %v21 = vld [vmem:[#allocation2] sm:$0xff]
    %v22 = vld [vmem:[#allocation2 + $0x8] sm:$0xff]
    %v23 = vmul.f32 %v21, 50.0
    %v24 = vmul.f32 %v22, 50.0
    %v25 = vtanh.pop %v23
    %v26 = vtanh.pop %v24
    %v27 = vadd.f32 %v25, 1.0
    %v28 = vadd.f32 %v26, 1.0
    %v29 = vmul.f32 %v27, 0.5
    %v30 = vmul.f32 %v28, 0.5
    %v31 = vmul.f32 %v21, %v29
    %v32 = vmul.f32 %v22, %v30
    %33 = vst [vmem:[#allocation5] sm:$0xff] %v31
    %34 = vst [vmem:[#allocation5 + $0x8] sm:$0xff] %v32
    // Predicated region
    $region10: #{tpu_custom_call.1} parent=1 // pred_check
      _
    $region11: #{tpu_custom_call.1} parent=1 // pred_check_branch
      %36 = sbr.rel (0) target = $region13
    $region12: #{tpu_custom_call.1} parent=1 // pred_region
      %s38 = ssub.s32 256, 256
      %39 = vsyncadd [#allocation4], %s38
      %s41 = sshll.u32 [#allocation5], 4
      %s42 = int_to_ptr.vmem [resolvable:$true] %s41
      %44 = dma.vmem_to_hbm [thread:$0]  %s42, 256, %s1, [#allocation4]
    $region13: #{tpu_custom_call.1} parent=1 // pred_fallthru
      _
    // Predicated region
    $region14: #{tpu_custom_call.1} parent=1 // pred_check
      _
    $region15: #{tpu_custom_call.1} parent=1 // pred_check_branch
      %46 = sbr.rel (0) target = $region17
    $region16: #{tpu_custom_call.1} parent=1 // pred_region
      %47 = dma.done [#allocation4], 256
    $region17: #{tpu_custom_call.1} parent=1 // pred_fallthru
      _
    %48 = vsyncpa [#allocation3], 1
    %49 = vsyncpa [#allocation4], 1

</llo_original>
